<compile_context>
chip_gen: v7x
topology: tpu7x:2x2x1
jax: 0.10.0
libtpu: 0.0.40
codegen_flags: <defaults>
</compile_context>

<pallas_src>
import jax
import jax.numpy as jnp
from jax.experimental import pallas as pl
from jax.experimental.pallas import tpu as pltpu

LATENT = 100
LATENT_PAD = 128
HIDDEN = 256
OUT_DIM = 32 * 32  # 1024


def generator_kernel(x_ref, w1_ref, b1_ref, w2_ref, b2_ref, w3_ref, b3_ref,
                     o_ref, xp_ref):
    # Zero-pad the latent tile 100 -> 128 in VMEM so the MXU contraction is aligned.
    # (Zero every step: with 'parallel' grids each core owns its own scratch, so a
    #  program_id==0 guard would not be safe; the fill is a few vreg stores.)
    xp_ref[...] = jnp.zeros_like(xp_ref)
    xp_ref[:, :LATENT] = x_ref[...].astype(jnp.bfloat16)

    # Linear(100 -> 256) + ReLU   (bf16 MXU matmul, f32 accumulate, f32 bias/act)
    h1 = jnp.dot(xp_ref[...], w1_ref[...], preferred_element_type=jnp.float32)
    h1 = jnp.maximum(h1 + b1_ref[...], 0.0)

    # Linear(256 -> 256) + ReLU
    h2 = jnp.dot(h1.astype(jnp.bfloat16), w2_ref[...],
                 preferred_element_type=jnp.float32)
    h2 = jnp.maximum(h2 + b2_ref[...], 0.0)

    # Linear(256 -> 1024) + Tanh  (bf16 tanh epilogue feeds the bf16 store directly)
    h3 = jnp.dot(h2.astype(jnp.bfloat16), w3_ref[...],
                 preferred_element_type=jnp.float32)
    o_ref[...] = jnp.tanh((h3 + b3_ref[...]).astype(jnp.bfloat16))


def _round_up(x, m):
    return ((x + m - 1) // m) * m


def prepare_params(params):
    """One-time weight packing (do this at init, not per forward call):
    w1 zero-padded to 128 rows + bf16, w2/w3 bf16, biases f32 (1, out)."""
    w1, b1, w2, b2, w3, b3 = params
    w1p = jnp.zeros((LATENT_PAD, HIDDEN), jnp.bfloat16)
    w1p = w1p.at[:LATENT, :].set(w1.astype(jnp.bfloat16))
    return (
        w1p,
        b1.reshape(1, HIDDEN).astype(jnp.float32),
        w2.astype(jnp.bfloat16),
        b2.reshape(1, HIDDEN).astype(jnp.float32),
        w3.astype(jnp.bfloat16),
        b3.reshape(1, OUT_DIM).astype(jnp.float32),
    )


def generator_forward(x, packed_params, *, bm=512):
    """x: (B, 100) latent vectors (any leading shape flattening to (-1, 100)).
    packed_params: output of prepare_params().  Returns (B, 32, 32) bf16."""
    w1p, b1f, w2b, b2f, w3b, b3f = packed_params
    x2d = x.reshape(-1, LATENT)
    B = x2d.shape[0]

    # Batch tile: large (MXU-filling / step-overhead-amortizing) by default, but
    #  * never bigger than the 8-aligned batch, and
    #  * capped so the grid has >=2 steps when B allows it (v7x megacore sharding).
    half = max(8, _round_up(pl.cdiv(B, 2), 8))
    bm_eff = max(8, min(bm, _round_up(B, 8), half))
    grid = (pl.cdiv(B, bm_eff),)

    out = pl.pallas_call(
        generator_kernel,
        out_shape=jax.ShapeDtypeStruct((B, OUT_DIM), jnp.bfloat16),
        grid_spec=pltpu.PrefetchScalarGridSpec(
            num_scalar_prefetch=0,
            grid=grid,
            in_specs=[
                pl.BlockSpec((bm_eff, LATENT), lambda i: (i, 0)),      # x tile (full 100 lanes)
                pl.BlockSpec((LATENT_PAD, HIDDEN), lambda i: (0, 0)),  # w1 (resident)
                pl.BlockSpec((1, HIDDEN), lambda i: (0, 0)),           # b1
                pl.BlockSpec((HIDDEN, HIDDEN), lambda i: (0, 0)),      # w2
                pl.BlockSpec((1, HIDDEN), lambda i: (0, 0)),           # b2
                pl.BlockSpec((HIDDEN, OUT_DIM), lambda i: (0, 0)),     # w3
                pl.BlockSpec((1, OUT_DIM), lambda i: (0, 0)),          # b3
            ],
            out_specs=pl.BlockSpec((bm_eff, OUT_DIM), lambda i: (i, 0)),
            scratch_shapes=[pltpu.VMEM((bm_eff, LATENT_PAD), jnp.bfloat16)],
        ),
        compiler_params=pltpu.CompilerParams(
            dimension_semantics=("parallel",),
        ),
    )(x2d, w1p, b1f, w2b, b2f, w3b, b3f)

    return out.reshape(B, 32, 32)


def init_params(key):
    """Deterministic init matching PyTorch nn.Linear default bounds.
    Weights stored transposed: (in_features, out_features), so y = x @ W + b."""
    def linear(key, fan_in, fan_out):
        kw, kb = jax.random.split(key)
        bound = 1.0 / jnp.sqrt(fan_in)
        w = jax.random.uniform(kw, (fan_in, fan_out), jnp.float32, -bound, bound)
        b = jax.random.uniform(kb, (1, fan_out), jnp.float32, -bound, bound)
        return w, b

    k1, k2, k3 = jax.random.split(key, 3)
    w1, b1 = linear(k1, LATENT, HIDDEN)
    w2, b2 = linear(k2, HIDDEN, HIDDEN)
    w3, b3 = linear(k3, HIDDEN, OUT_DIM)
    return (w1, b1, w2, b2, w3, b3)


def reference_forward(x, params):
    """Pure-JAX f32 reference of the PyTorch module."""
    w1, b1, w2, b2, w3, b3 = params
    h = x.reshape(-1, LATENT).astype(jnp.float32)
    h = jnp.maximum(h @ w1 + b1, 0.0)
    h = jnp.maximum(h @ w2 + b2, 0.0)
    h = jnp.tanh(h @ w3 + b3)
    return h.reshape(-1, 32, 32)


if __name__ == "__main__":
    key = jax.random.PRNGKey(0)
    kx, kp, kx2 = jax.random.split(key, 3)
    params = init_params(kp)
    packed = jax.block_until_ready(prepare_params(params))   # one-time weight packing

    # Small batch (single grid step, tile capped to the batch).
    B = 8
    x = jax.random.normal(kx, (B, LATENT), dtype=jnp.float32)
    out = jax.block_until_ready(generator_forward(x, packed))
    ref = reference_forward(x, params)
    assert out.shape == (B, 32, 32), out.shape
    assert jnp.allclose(out, ref, atol=3e-2), "mismatch vs reference (small batch)"

    # Non-divisible batch: exercises multi-step parallel grid + masked partial last block.
    B2 = 300
    x2 = jax.random.normal(kx2, (B2, LATENT), dtype=jnp.float32)
    out2 = jax.block_until_ready(generator_forward(x2, packed, bm=128))
    ref2 = reference_forward(x2, params)
    assert out2.shape == (B2, 32, 32), out2.shape
    assert jnp.allclose(out2, ref2, atol=3e-2), "mismatch vs reference (partial block)"

    print("KERNEL_OK")
</pallas_src>

<mosaic_0001>
module attributes {stable_mosaic.version = 11 : i64} {
  func.func @generator_kernel(%arg0: i32, %arg1: memref<8x100xf32, #tpu.memory_space<vmem>>, %arg2: memref<128x256xbf16, #tpu.memory_space<vmem>>, %arg3: memref<1x256xf32, #tpu.memory_space<vmem>>, %arg4: memref<256x256xbf16, #tpu.memory_space<vmem>>, %arg5: memref<1x256xf32, #tpu.memory_space<vmem>>, %arg6: memref<256x1024xbf16, #tpu.memory_space<vmem>>, %arg7: memref<1x1024xf32, #tpu.memory_space<vmem>>, %arg8: memref<8x1024xbf16, #tpu.memory_space<vmem>>, %arg9: memref<8x128xbf16, #tpu.memory_space<vmem>>) attributes {dimension_semantics = [#tpu.dimension_semantics<parallel>], iteration_bounds = array<i64: 1>, scalar_prefetch = 0 : i64, scratch_operands = 1 : i64, tpu.core_type = #tpu.core_type<tc>, window_params = [{transform_indices = @transform_0, window_bounds = array<i64: 8, 100>}, {pipeline_mode = #tpu.pipeline_mode<synchronous>, transform_indices = @transform_1, window_bounds = array<i64: 128, 256>}, {pipeline_mode = #tpu.pipeline_mode<synchronous>, transform_indices = @transform_2, window_bounds = array<i64: 1, 256>}, {pipeline_mode = #tpu.pipeline_mode<synchronous>, transform_indices = @transform_3, window_bounds = array<i64: 256, 256>}, {pipeline_mode = #tpu.pipeline_mode<synchronous>, transform_indices = @transform_4, window_bounds = array<i64: 1, 256>}, {pipeline_mode = #tpu.pipeline_mode<synchronous>, transform_indices = @transform_5, window_bounds = array<i64: 256, 1024>}, {pipeline_mode = #tpu.pipeline_mode<synchronous>, transform_indices = @transform_6, window_bounds = array<i64: 1, 1024>}, {transform_indices = @transform_7, window_bounds = array<i64: 8, 1024>}]} {
    %cst = arith.constant 0.000000e+00 : bf16
    %0 = vector.broadcast %cst : bf16 to vector<8x128xbf16>
    %c0 = arith.constant 0 : index
    %c0_0 = arith.constant 0 : index
    %1 = vector.load %arg9[%c0, %c0_0] : memref<8x128xbf16, #tpu.memory_space<vmem>>, vector<8x128xbf16>
    tpu.vector_store %arg9[%c0, %c0_0], %0 {strides = array<i32>} : memref<8x128xbf16, #tpu.memory_space<vmem>>, vector<8x128xbf16>,
    %c0_1 = arith.constant 0 : index
    %c0_2 = arith.constant 0 : index
    %2 = vector.load %arg1[%c0_1, %c0_2] : memref<8x100xf32, #tpu.memory_space<vmem>>, vector<8x100xf32>
    %3 = arith.truncf %2 : vector<8x100xf32> to vector<8x100xbf16>
    %c0_3 = arith.constant 0 : index
    %c0_4 = arith.constant 0 : index
    %4 = vector.load %arg9[%c0_3, %c0_4] : memref<8x128xbf16, #tpu.memory_space<vmem>>, vector<8x100xbf16>
    tpu.vector_store %arg9[%c0_3, %c0_4], %3 {strides = array<i32>} : memref<8x128xbf16, #tpu.memory_space<vmem>>, vector<8x100xbf16>,
    %c0_5 = arith.constant 0 : index
    %c0_6 = arith.constant 0 : index
    %5 = vector.load %arg9[%c0_5, %c0_6] : memref<8x128xbf16, #tpu.memory_space<vmem>>, vector<8x128xbf16>
    %c0_7 = arith.constant 0 : index
    %c0_8 = arith.constant 0 : index
    %6 = vector.load %arg2[%c0_7, %c0_8] : memref<128x256xbf16, #tpu.memory_space<vmem>>, vector<128x256xbf16>
    %cst_9 = arith.constant dense<0.000000e+00> : vector<8x256xf32>
    %7 = tpu.matmul %5, %6, %cst_9 {dimension_numbers = #tpu.dot_dimension_numbers<[1], [0], [0], [1], [0, 0, 1, 1], [], []>} : vector<8x128xbf16>, vector<128x256xbf16>, vector<8x256xf32> -> vector<8x256xf32>
    %c0_10 = arith.constant 0 : index
    %c0_11 = arith.constant 0 : index
    %8 = vector.load %arg3[%c0_10, %c0_11] : memref<1x256xf32, #tpu.memory_space<vmem>>, vector<1x256xf32>
    %9 = vector.broadcast %8 : vector<1x256xf32> to vector<8x256xf32>
    %10 = arith.addf %7, %9 : vector<8x256xf32>
    %cst_12 = arith.constant 0.000000e+00 : f32
    %11 = vector.broadcast %cst_12 : f32 to vector<8x256xf32>
    %12 = arith.maximumf %10, %11 : vector<8x256xf32>
    %13 = arith.truncf %12 : vector<8x256xf32> to vector<8x256xbf16>
    %c0_13 = arith.constant 0 : index
    %c0_14 = arith.constant 0 : index
    %14 = vector.load %arg4[%c0_13, %c0_14] : memref<256x256xbf16, #tpu.memory_space<vmem>>, vector<256x256xbf16>
    %cst_15 = arith.constant dense<0.000000e+00> : vector<8x256xf32>
    %15 = tpu.matmul %13, %14, %cst_15 {dimension_numbers = #tpu.dot_dimension_numbers<[1], [0], [0], [1], [0, 0, 1, 1], [], []>} : vector<8x256xbf16>, vector<256x256xbf16>, vector<8x256xf32> -> vector<8x256xf32>
    %c0_16 = arith.constant 0 : index
    %c0_17 = arith.constant 0 : index
    %16 = vector.load %arg5[%c0_16, %c0_17] : memref<1x256xf32, #tpu.memory_space<vmem>>, vector<1x256xf32>
    %17 = vector.broadcast %16 : vector<1x256xf32> to vector<8x256xf32>
    %18 = arith.addf %15, %17 : vector<8x256xf32>
    %cst_18 = arith.constant 0.000000e+00 : f32
    %19 = vector.broadcast %cst_18 : f32 to vector<8x256xf32>
    %20 = arith.maximumf %18, %19 : vector<8x256xf32>
    %21 = arith.truncf %20 : vector<8x256xf32> to vector<8x256xbf16>
    %c0_19 = arith.constant 0 : index
    %c0_20 = arith.constant 0 : index
    %22 = vector.load %arg6[%c0_19, %c0_20] : memref<256x1024xbf16, #tpu.memory_space<vmem>>, vector<256x1024xbf16>
    %cst_21 = arith.constant dense<0.000000e+00> : vector<8x1024xf32>
    %23 = tpu.matmul %21, %22, %cst_21 {dimension_numbers = #tpu.dot_dimension_numbers<[1], [0], [0], [1], [0, 0, 1, 1], [], []>} : vector<8x256xbf16>, vector<256x1024xbf16>, vector<8x1024xf32> -> vector<8x1024xf32>
    %c0_22 = arith.constant 0 : index
    %c0_23 = arith.constant 0 : index
    %24 = vector.load %arg7[%c0_22, %c0_23] : memref<1x1024xf32, #tpu.memory_space<vmem>>, vector<1x1024xf32>
    %25 = vector.broadcast %24 : vector<1x1024xf32> to vector<8x1024xf32>
    %26 = arith.addf %23, %25 : vector<8x1024xf32>
    %27 = arith.truncf %26 : vector<8x1024xf32> to vector<8x1024xbf16>
    %28 = math.tanh %27 : vector<8x1024xbf16>
    %c0_24 = arith.constant 0 : index
    %c0_25 = arith.constant 0 : index
    %29 = vector.load %arg8[%c0_24, %c0_25] : memref<8x1024xbf16, #tpu.memory_space<vmem>>, vector<8x1024xbf16>
    tpu.vector_store %arg8[%c0_24, %c0_25], %28 {strides = array<i32>} : memref<8x1024xbf16, #tpu.memory_space<vmem>>, vector<8x1024xbf16>,
    return
  }
  func.func @transform_0(%arg0: i32) -> (i32, i32) {
    %c0_i32 = arith.constant 0 : i32
    %c0_i32_0 = arith.constant 0 : i32
    return %arg0, %c0_i32 : i32, i32
  }
  func.func @transform_1(%arg0: i32) -> (i32, i32) {
    %c0_i32 = arith.constant 0 : i32
    %c0_i32_0 = arith.constant 0 : i32
    %c0_i32_1 = arith.constant 0 : i32
    return %c0_i32, %c0_i32_0 : i32, i32
  }
  func.func @transform_2(%arg0: i32) -> (i32, i32) {
    %c0_i32 = arith.constant 0 : i32
    %c0_i32_0 = arith.constant 0 : i32
    %c0_i32_1 = arith.constant 0 : i32
    return %c0_i32, %c0_i32_0 : i32, i32
  }
  func.func @transform_3(%arg0: i32) -> (i32, i32) {
    %c0_i32 = arith.constant 0 : i32
    %c0_i32_0 = arith.constant 0 : i32
    %c0_i32_1 = arith.constant 0 : i32
    return %c0_i32, %c0_i32_0 : i32, i32
  }
  func.func @transform_4(%arg0: i32) -> (i32, i32) {
    %c0_i32 = arith.constant 0 : i32
    %c0_i32_0 = arith.constant 0 : i32
    %c0_i32_1 = arith.constant 0 : i32
    return %c0_i32, %c0_i32_0 : i32, i32
  }
  func.func @transform_5(%arg0: i32) -> (i32, i32) {
    %c0_i32 = arith.constant 0 : i32
    %c0_i32_0 = arith.constant 0 : i32
    %c0_i32_1 = arith.constant 0 : i32
    return %c0_i32, %c0_i32_0 : i32, i32
  }
  func.func @transform_6(%arg0: i32) -> (i32, i32) {
    %c0_i32 = arith.constant 0 : i32
    %c0_i32_0 = arith.constant 0 : i32
    %c0_i32_1 = arith.constant 0 : i32
    return %c0_i32, %c0_i32_0 : i32, i32
  }
  func.func @transform_7(%arg0: i32) -> (i32, i32) {
    %c0_i32 = arith.constant 0 : i32
    %c0_i32_0 = arith.constant 0 : i32
    return %arg0, %c0_i32 : i32, i32
  }
}

</mosaic_0001>

<llo_original>
// kernel: tpu_custom_call.1
$region0: #{tpu_custom_call.1}
  #allocation0 [shape = 'u32[]', space=smem, size = 0x4, offset = 0x4, fixed_abs, tag = 'smem constant byte address 0x4 - core index']
  #allocation1 [shape = 'u32[144,128]{1,0:T(1,128)}', space=vmem, size = 0x12000, scoped, tag = 'internal scratch']
  #allocation2 [shape = 'bf16[8,128]{1,0:T(8,128)(2,1)}', space=vmem, size = 0x800, scoped, tag = 'scratch operand']
  %s0 = inlined_call_operand.hbm [shape: f32[8,100], index: 0, kind: input, shape index: {}]
  %s1 = inlined_call_operand.hbm [shape: bf16[128,256], index: 1, kind: input, shape index: {}]
  %s2 = inlined_call_operand.vmem [shape: f32[1,256], index: 2, kind: input, shape index: {}]
  %s3 = inlined_call_operand.hbm [shape: bf16[256,256], index: 3, kind: input, shape index: {}]
  %s4 = inlined_call_operand.vmem [shape: f32[1,256], index: 4, kind: input, shape index: {}]
  %s5 = inlined_call_operand.hbm [shape: bf16[256,1024], index: 5, kind: input, shape index: {}]
  %s6 = inlined_call_operand.vmem [shape: f32[1,1024], index: 6, kind: input, shape index: {}]
  %s7 = inlined_call_operand.hbm [shape: bf16[8,1024], index: 7, kind: output, shape index: {}]
  %s8 = sld [smem:[#allocation0]]
  $region54: #{tpu_custom_call.1} parent=0
    _
  %s10 = ssub.s32 1, %s8
  %s11 = scalar_select 0, %s10, %s8
  $region1: #{tpu_custom_call.1} parent=0
    #allocation3 [shape = 'u8[4096]{0}', space=vmem, size = 0x1000, scoped, tag = 'input window, operand 0, single buffered']
    #allocation4 [shape = 's32[1]{0}', space=sflag, size = 0x4, scoped, tag = 'scoped memory for tpu_custom_call.1']
    #allocation5 [shape = 's32[1]{0}', space=sflag, size = 0x4, scoped, tag = 'scoped memory for tpu_custom_call.1']
    #allocation6 [shape = 'u8[65536]{0}', space=vmem, size = 0x10000, scoped, tag = 'input window, operand 1, single buffered']
    #allocation7 [shape = 's32[1]{0}', space=sflag, size = 0x4, scoped, tag = 'scoped memory for tpu_custom_call.1']
    #allocation8 [shape = 'u8[131072]{0}', space=vmem, size = 0x20000, scoped, tag = 'input window, operand 3, single buffered']
    #allocation9 [shape = 'u8[524288]{0}', space=vmem, size = 0x80000, scoped, tag = 'input window, operand 5, single buffered']
    #allocation10 [shape = 's32[1]{0}', space=sflag, size = 0x4, scoped, tag = 'scoped memory for tpu_custom_call.1']
    #allocation11 [shape = 'u8[16384]{0}', space=vmem, size = 0x4000, scoped, tag = 'output window, operand 0, single buffered']
    %12 = vsyncpa [#allocation4], 0
    %13 = vsyncpa [#allocation7], 0
    %14 = vsyncpa [#allocation10], 0
    %15 = vsyncpa [#allocation5], 0
    // Predicated region
    $region2: #{tpu_custom_call.1} parent=1 // pred_check
      _
    $region3: #{tpu_custom_call.1} parent=1 // pred_check_branch
      %17 = sbr.rel (0) target = $region5
    $region4: #{tpu_custom_call.1} parent=1 // pred_region
      %s19 = ssub.s32 128, 128
      %20 = vsyncadd [#allocation4], %s19
      %s22 = sshll.u32 [#allocation3], 4
      %s23 = int_to_ptr.vmem [resolvable:$true] %s22
      %25 = dma.hbm_to_vmem [thread:$0]  %s0, 128, %s23, [#allocation4]
    $region5: #{tpu_custom_call.1} parent=1 // pred_fallthru
      _
    // Predicated region
    $region6: #{tpu_custom_call.1} parent=1 // pred_check
      _
    $region7: #{tpu_custom_call.1} parent=1 // pred_check_branch
      %27 = sbr.rel (0) target = $region9
    $region8: #{tpu_custom_call.1} parent=1 // pred_region
      %s29 = ssub.s32 2048, 2048
      %30 = vsyncadd [#allocation7], %s29
      %s31 = sshll.u32 [#allocation6], 4
      %s32 = int_to_ptr.vmem [resolvable:$true] %s31
      %37 = dma.hbm_to_vmem [thread:$0]  %s1, 2048, %s32, [#allocation7], 128, 128, 8
    $region9: #{tpu_custom_call.1} parent=1 // pred_fallthru
      _
    // Predicated region
    $region10: #{tpu_custom_call.1} parent=1 // pred_check
      _
    $region11: #{tpu_custom_call.1} parent=1 // pred_check_branch
      %39 = sbr.rel (0) target = $region13
    $region12: #{tpu_custom_call.1} parent=1 // pred_region
      _
    $region13: #{tpu_custom_call.1} parent=1 // pred_fallthru
      _
    // Predicated region
    $region14: #{tpu_custom_call.1} parent=1 // pred_check
      _
    $region15: #{tpu_custom_call.1} parent=1 // pred_check_branch
      %41 = sbr.rel (0) target = $region17
    $region16: #{tpu_custom_call.1} parent=1 // pred_region
      %s43 = ssub.s32 4096, 4096
      %44 = vsyncadd [#allocation7], %s43
      %s45 = sshll.u32 [#allocation8], 4
      %s46 = int_to_ptr.vmem [resolvable:$true] %s45
      %51 = dma.hbm_to_vmem [thread:$0]  %s3, 4096, %s46, [#allocation7], 128, 128, 8
    $region17: #{tpu_custom_call.1} parent=1 // pred_fallthru
      _
    // Predicated region
    $region18: #{tpu_custom_call.1} parent=1 // pred_check
      _
    $region19: #{tpu_custom_call.1} parent=1 // pred_check_branch
      %53 = sbr.rel (0) target = $region21
    $region20: #{tpu_custom_call.1} parent=1 // pred_region
      _
    $region21: #{tpu_custom_call.1} parent=1 // pred_fallthru
      _
    // Predicated region
    $region22: #{tpu_custom_call.1} parent=1 // pred_check
      _
    $region23: #{tpu_custom_call.1} parent=1 // pred_check_branch
      %55 = sbr.rel (0) target = $region25
    $region24: #{tpu_custom_call.1} parent=1 // pred_region
      %s57 = ssub.s32 16384, 16384
      %58 = vsyncadd [#allocation10], %s57
      %s59 = sshll.u32 [#allocation9], 4
      %s60 = int_to_ptr.vmem [resolvable:$true] %s59
      %65 = dma.hbm_to_vmem [thread:$0]  %s5, 16384, %s60, [#allocation10], 512, 512, 32
    $region25: #{tpu_custom_call.1} parent=1 // pred_fallthru
      _
    // Predicated region
    $region26: #{tpu_custom_call.1} parent=1 // pred_check
      _
    $region27: #{tpu_custom_call.1} parent=1 // pred_check_branch
      %67 = sbr.rel (0) target = $region29
    $region28: #{tpu_custom_call.1} parent=1 // pred_region
      _
    $region29: #{tpu_custom_call.1} parent=1 // pred_fallthru
      _
    // Predicated region
    $region30: #{tpu_custom_call.1} parent=1 // pred_check
      _
    $region31: #{tpu_custom_call.1} parent=1 // pred_check_branch
      %69 = sbr.rel (0) target = $region33
    $region32: #{tpu_custom_call.1} parent=1 // pred_region
      %70 = dma.done [#allocation4], 128
    $region33: #{tpu_custom_call.1} parent=1 // pred_fallthru
      _
    // Predicated region
    $region34: #{tpu_custom_call.1} parent=1 // pred_check
      _
    $region35: #{tpu_custom_call.1} parent=1 // pred_check_branch
      %72 = sbr.rel (0) target = $region37
    $region36: #{tpu_custom_call.1} parent=1 // pred_region
      %73 = dma.done [#allocation7], 2048
    $region37: #{tpu_custom_call.1} parent=1 // pred_fallthru
      _
    // Predicated region
    $region38: #{tpu_custom_call.1} parent=1 // pred_check
      _
    $region39: #{tpu_custom_call.1} parent=1 // pred_check_branch
      %75 = sbr.rel (0) target = $region41
    $region40: #{tpu_custom_call.1} parent=1 // pred_region
      %76 = dma.done [#allocation7], 4096
    $region41: #{tpu_custom_call.1} parent=1 // pred_fallthru
      _
    // Predicated region
    $region42: #{tpu_custom_call.1} parent=1 // pred_check
      _
    $region43: #{tpu_custom_call.1} parent=1 // pred_check_branch
      %78 = sbr.rel (0) target = $region45
    $region44: #{tpu_custom_call.1} parent=1 // pred_region
      %79 = dma.done [#allocation10], 16384
    $region45: #{tpu_custom_call.1} parent=1 // pred_fallthru
      _
    %81 = vst [vmem:[#allocation2] sm:$0xf] 0
    %v82 = vld [vmem:[#allocation3] sm:$0xff]
    %v83 = vpack.c.bf16 %v82, %v82
    %vm84 = vcmask 814080
    %85 = vst.msk [vmem:[#allocation2] sm:$0xf] %vm84, %v83
    %v86 = vld [vmem:[#allocation2] sm:$0xf]
    %v87 = vld [vmem:[#allocation6] sm:$0xff]
    %v88 = vld [vmem:[#allocation6 + $0x8] sm:$0xff]
    %v89 = vld [vmem:[#allocation6 + $0x10] sm:$0xff]
    %v90 = vld [vmem:[#allocation6 + $0x18] sm:$0xff]
    %v91 = vld [vmem:[#allocation6 + $0x20] sm:$0xff]
    %v92 = vld [vmem:[#allocation6 + $0x28] sm:$0xff]
    %v93 = vld [vmem:[#allocation6 + $0x30] sm:$0xff]
    %v94 = vld [vmem:[#allocation6 + $0x38] sm:$0xff]
    %v95 = vld [vmem:[#allocation6 + $0x40] sm:$0xff]
    %v96 = vld [vmem:[#allocation6 + $0x48] sm:$0xff]
    %v97 = vld [vmem:[#allocation6 + $0x50] sm:$0xff]
    %v98 = vld [vmem:[#allocation6 + $0x58] sm:$0xff]
    %v99 = vld [vmem:[#allocation6 + $0x60] sm:$0xff]
    %v100 = vld [vmem:[#allocation6 + $0x68] sm:$0xff]
    %v101 = vld [vmem:[#allocation6 + $0x70] sm:$0xff]
    %v102 = vld [vmem:[#allocation6 + $0x78] sm:$0xff]
    %v103 = vld [vmem:[%s2] sm:$0x3]
    %v105 = vlaneseq
    %v106 = vshrl.u32 %v105, 7
    %v107 = vsub.s32 0, %v106
    %v108 = vrot.slane %v103, %v107
    %v109 = vlaneseq
    %v110 = vshrl.u32 %v109, 7
    %v111 = vsub.s32 1, %v110
    %v112 = vrot.slane %v103, %v111
    %v131 = vunpack.c.l.b16 %v87
    %v132 = vunpack.c.h.b16 %v87
    %v133 = vunpack.c.l.b16 %v88
    %v134 = vunpack.c.h.b16 %v88
    %v135 = vunpack.c.l.b16 %v89
    %v136 = vunpack.c.h.b16 %v89
    %v137 = vunpack.c.l.b16 %v90
    %v138 = vunpack.c.h.b16 %v90
    %v139 = vunpack.c.l.b16 %v91
    %v140 = vunpack.c.h.b16 %v91
    %v141 = vunpack.c.l.b16 %v92
    %v142 = vunpack.c.h.b16 %v92
    %v143 = vunpack.c.l.b16 %v93
    %v144 = vunpack.c.h.b16 %v93
    %v145 = vunpack.c.l.b16 %v94
    %v146 = vunpack.c.h.b16 %v94
    %v147 = vunpack.c.l.b16 %v95
    %v148 = vunpack.c.h.b16 %v95
    %v149 = vunpack.c.l.b16 %v96
    %v150 = vunpack.c.h.b16 %v96
    %v151 = vunpack.c.l.b16 %v97
    %v152 = vunpack.c.h.b16 %v97
    %v153 = vunpack.c.l.b16 %v98
    %v154 = vunpack.c.h.b16 %v98
    %v155 = vunpack.c.l.b16 %v99
    %v156 = vunpack.c.h.b16 %v99
    %v157 = vunpack.c.l.b16 %v100
    %v158 = vunpack.c.h.b16 %v100
    %v159 = vunpack.c.l.b16 %v101
    %v160 = vunpack.c.h.b16 %v101
    %v161 = vunpack.c.l.b16 %v102
    %v162 = vunpack.c.h.b16 %v102
    %v163 = vpack.c.b16 %v133, %v131
    %v164 = vpack.c.b16 %v134, %v132
    %v165 = vpack.c.b16 %v137, %v135
    %v166 = vpack.c.b16 %v138, %v136
    %v167 = vpack.c.b16 %v141, %v139
    %v168 = vpack.c.b16 %v142, %v140
    %v169 = vpack.c.b16 %v145, %v143
    %v170 = vpack.c.b16 %v146, %v144
    %v171 = vpack.c.b16 %v149, %v147
    %v172 = vpack.c.b16 %v150, %v148
    %v173 = vpack.c.b16 %v153, %v151
    %v174 = vpack.c.b16 %v154, %v152
    %v175 = vpack.c.b16 %v157, %v155
    %v176 = vpack.c.b16 %v158, %v156
    %v177 = vpack.c.b16 %v161, %v159
    %v178 = vpack.c.b16 %v162, %v160
    %195 = vmatprep.subr.bf16.mxu0 %v164
    %196 = vmatpush1.bf16.msra.mxu0 %v163
    %197 = vmatprep.subr.bf16.mxu0 %v166
    %198 = vmatpush1.bf16.msra.mxu0 %v165
    %199 = vmatprep.subr.bf16.mxu0 %v168
    %200 = vmatpush1.bf16.msra.mxu0 %v167
    %201 = vmatprep.subr.bf16.mxu0 %v170
    %202 = vmatpush1.bf16.msra.mxu0 %v169
    %203 = vmatprep.subr.bf16.mxu0 %v172
    %204 = vmatpush1.bf16.msra.mxu0 %v171
    %205 = vmatprep.subr.bf16.mxu0 %v174
    %206 = vmatpush1.bf16.msra.mxu0 %v173
    %207 = vmatprep.subr.bf16.mxu0 %v176
    %208 = vmatpush1.bf16.msra.mxu0 %v175
    %209 = vmatprep.subr.bf16.mxu0 %v178
    %210 = vmatpush1.bf16.msra.mxu0 %v177
    %211 = vmatprep.subr.bf16.mxu0 0
    %212 = vmatpush1.bf16.msra.mxu0 0
    %213 = vmatprep.subr.bf16.mxu0 0
    %214 = vmatpush1.bf16.msra.mxu0 0
    %215 = vmatprep.subr.bf16.mxu0 0
    %216 = vmatpush1.bf16.msra.mxu0 0
    %217 = vmatprep.subr.bf16.mxu0 0
    %218 = vmatpush1.bf16.msra.mxu0 0
    %219 = vmatprep.subr.bf16.mxu0 0
    %220 = vmatpush1.bf16.msra.mxu0 0
    %221 = vmatprep.subr.bf16.mxu0 0
    %222 = vmatpush1.bf16.msra.mxu0 0
    %223 = vmatprep.subr.bf16.mxu0 0
    %224 = vmatpush1.bf16.msra.mxu0 0
    %225 = vmatprep.subr.bf16.mxu0 0
    %226 = vmatpush1.bf16.msra.mxu0 0
    %227 = vmatprep.mubr.bf16.mxu0 0
    %228 = vmatmul.mubr.bf16.gmra.mrb[0].mxu0 %v86
    %v229 = vpop.f32.mrb[0].mxu0
    %v230 = vadd.f32 %v108, %v229
    %v231 = vpop.f32.mrb[0].mxu0
    %v232 = vadd.f32 %v112, %v231
    %v233 = vpop.f32.mrb[0].mxu0
    %v234 = vpop.f32.mrb[0].mxu0
    %235 = vdwg.mxu0
    %v236 = vmax.f32 %v230, 0.0
    %v237 = vmax.f32 %v232, 0.0
    %v238 = vpack.c.bf16 %v236, %v236
    %v239 = vpack.c.bf16 %v237, %v237
    %v240 = vld [vmem:[#allocation8] sm:$0xff]
    %v241 = vld [vmem:[#allocation8 + $0x8] sm:$0xff]
    %v242 = vld [vmem:[#allocation8 + $0x10] sm:$0xff]
    %v243 = vld [vmem:[#allocation8 + $0x18] sm:$0xff]
    %v244 = vld [vmem:[#allocation8 + $0x20] sm:$0xff]
    %v245 = vld [vmem:[#allocation8 + $0x28] sm:$0xff]
    %v246 = vld [vmem:[#allocation8 + $0x30] sm:$0xff]
    %v247 = vld [vmem:[#allocation8 + $0x38] sm:$0xff]
    %v248 = vld [vmem:[#allocation8 + $0x40] sm:$0xff]
    %v249 = vld [vmem:[#allocation8 + $0x48] sm:$0xff]
    %v250 = vld [vmem:[#allocation8 + $0x50] sm:$0xff]
    %v251 = vld [vmem:[#allocation8 + $0x58] sm:$0xff]
    %v252 = vld [vmem:[#allocation8 + $0x60] sm:$0xff]
    %v253 = vld [vmem:[#allocation8 + $0x68] sm:$0xff]
    %v254 = vld [vmem:[#allocation8 + $0x70] sm:$0xff]
    %v255 = vld [vmem:[#allocation8 + $0x78] sm:$0xff]
    %v256 = vld [vmem:[#allocation8 + $0x80] sm:$0xff]
    %v257 = vld [vmem:[#allocation8 + $0x88] sm:$0xff]
    %v258 = vld [vmem:[#allocation8 + $0x90] sm:$0xff]
    %v259 = vld [vmem:[#allocation8 + $0x98] sm:$0xff]
    %v260 = vld [vmem:[#allocation8 + $0xa0] sm:$0xff]
    %v261 = vld [vmem:[#allocation8 + $0xa8] sm:$0xff]
    %v262 = vld [vmem:[#allocation8 + $0xb0] sm:$0xff]
    %v263 = vld [vmem:[#allocation8 + $0xb8] sm:$0xff]
    %v264 = vld [vmem:[#allocation8 + $0xc0] sm:$0xff]
    %v265 = vld [vmem:[#allocation8 + $0xc8] sm:$0xff]
    %v266 = vld [vmem:[#allocation8 + $0xd0] sm:$0xff]
    %v267 = vld [vmem:[#allocation8 + $0xd8] sm:$0xff]
    %v268 = vld [vmem:[#allocation8 + $0xe0] sm:$0xff]
    %v269 = vld [vmem:[#allocation8 + $0xe8] sm:$0xff]
    %v270 = vld [vmem:[#allocation8 + $0xf0] sm:$0xff]
    %v271 = vld [vmem:[#allocation8 + $0xf8] sm:$0xff]
    %v272 = vld [vmem:[%s4] sm:$0x3]
    %v274 = vlaneseq
    %v275 = vshrl.u32 %v274, 7
    %v276 = vsub.s32 0, %v275
    %v277 = vrot.slane %v272, %v276
    %v278 = vlaneseq
    %v279 = vshrl.u32 %v278, 7
    %v280 = vsub.s32 1, %v279
    %v281 = vrot.slane %v272, %v280
    %v316 = vunpack.c.l.b16 %v240
    %v317 = vunpack.c.h.b16 %v240
    %v318 = vunpack.c.l.b16 %v241
    %v319 = vunpack.c.h.b16 %v241
    %v320 = vunpack.c.l.b16 %v242
    %v321 = vunpack.c.h.b16 %v242
    %v322 = vunpack.c.l.b16 %v243
    %v323 = vunpack.c.h.b16 %v243
    %v324 = vunpack.c.l.b16 %v244
    %v325 = vunpack.c.h.b16 %v244
    %v326 = vunpack.c.l.b16 %v245
    %v327 = vunpack.c.h.b16 %v245
    %v328 = vunpack.c.l.b16 %v246
    %v329 = vunpack.c.h.b16 %v246
    %v330 = vunpack.c.l.b16 %v247
    %v331 = vunpack.c.h.b16 %v247
    %v332 = vunpack.c.l.b16 %v248
    %v333 = vunpack.c.h.b16 %v248
    %v334 = vunpack.c.l.b16 %v249
    %v335 = vunpack.c.h.b16 %v249
    %v336 = vunpack.c.l.b16 %v250
    %v337 = vunpack.c.h.b16 %v250
    %v338 = vunpack.c.l.b16 %v251
    %v339 = vunpack.c.h.b16 %v251
    %v340 = vunpack.c.l.b16 %v252
    %v341 = vunpack.c.h.b16 %v252
    %v342 = vunpack.c.l.b16 %v253
    %v343 = vunpack.c.h.b16 %v253
    %v344 = vunpack.c.l.b16 %v254
    %v345 = vunpack.c.h.b16 %v254
    %v346 = vunpack.c.l.b16 %v255
    %v347 = vunpack.c.h.b16 %v255
    %v348 = vunpack.c.l.b16 %v256
    %v349 = vunpack.c.h.b16 %v256
    %v350 = vunpack.c.l.b16 %v257
    %v351 = vunpack.c.h.b16 %v257
    %v352 = vunpack.c.l.b16 %v258
    %v353 = vunpack.c.h.b16 %v258
    %v354 = vunpack.c.l.b16 %v259
    %v355 = vunpack.c.h.b16 %v259
    %v356 = vunpack.c.l.b16 %v260
    %v357 = vunpack.c.h.b16 %v260
    %v358 = vunpack.c.l.b16 %v261
    %v359 = vunpack.c.h.b16 %v261
    %v360 = vunpack.c.l.b16 %v262
    %v361 = vunpack.c.h.b16 %v262
    %v362 = vunpack.c.l.b16 %v263
    %v363 = vunpack.c.h.b16 %v263
    %v364 = vunpack.c.l.b16 %v264
    %v365 = vunpack.c.h.b16 %v264
    %v366 = vunpack.c.l.b16 %v265
    %v367 = vunpack.c.h.b16 %v265
    %v368 = vunpack.c.l.b16 %v266
    %v369 = vunpack.c.h.b16 %v266
    %v370 = vunpack.c.l.b16 %v267
    %v371 = vunpack.c.h.b16 %v267
    %v372 = vunpack.c.l.b16 %v268
    %v373 = vunpack.c.h.b16 %v268
    %v374 = vunpack.c.l.b16 %v269
    %v375 = vunpack.c.h.b16 %v269
    %v376 = vunpack.c.l.b16 %v270
    %v377 = vunpack.c.h.b16 %v270
    %v378 = vunpack.c.l.b16 %v271
    %v379 = vunpack.c.h.b16 %v271
    %v380 = vpack.c.b16 %v318, %v316
    %v381 = vpack.c.b16 %v319, %v317
    %v382 = vpack.c.b16 %v322, %v320
    %v383 = vpack.c.b16 %v323, %v321
    %v384 = vpack.c.b16 %v326, %v324
    %v385 = vpack.c.b16 %v327, %v325
    %v386 = vpack.c.b16 %v330, %v328
    %v387 = vpack.c.b16 %v331, %v329
    %v388 = vpack.c.b16 %v334, %v332
    %v389 = vpack.c.b16 %v335, %v333
    %v390 = vpack.c.b16 %v338, %v336
    %v391 = vpack.c.b16 %v339, %v337
    %v392 = vpack.c.b16 %v342, %v340
    %v393 = vpack.c.b16 %v343, %v341
    %v394 = vpack.c.b16 %v346, %v344
    %v395 = vpack.c.b16 %v347, %v345
    %v396 = vpack.c.b16 %v350, %v348
    %v397 = vpack.c.b16 %v351, %v349
    %v398 = vpack.c.b16 %v354, %v352
    %v399 = vpack.c.b16 %v355, %v353
    %v400 = vpack.c.b16 %v358, %v356
    %v401 = vpack.c.b16 %v359, %v357
    %v402 = vpack.c.b16 %v362, %v360
    %v403 = vpack.c.b16 %v363, %v361
    %v404 = vpack.c.b16 %v366, %v364
    %v405 = vpack.c.b16 %v367, %v365
    %v406 = vpack.c.b16 %v370, %v368
    %v407 = vpack.c.b16 %v371, %v369
    %v408 = vpack.c.b16 %v374, %v372
    %v409 = vpack.c.b16 %v375, %v373
    %v410 = vpack.c.b16 %v378, %v376
    %v411 = vpack.c.b16 %v379, %v377
    %444 = vmatprep.subr.bf16.mxu0 %v381
    %445 = vmatpush1.bf16.msra.mxu0 %v380
    %446 = vmatprep.subr.bf16.mxu0 %v383
    %447 = vmatpush1.bf16.msra.mxu0 %v382
    %448 = vmatprep.subr.bf16.mxu0 %v385
    %449 = vmatpush1.bf16.msra.mxu0 %v384
    %450 = vmatprep.subr.bf16.mxu0 %v387
    %451 = vmatpush1.bf16.msra.mxu0 %v386
    %452 = vmatprep.subr.bf16.mxu0 %v389
    %453 = vmatpush1.bf16.msra.mxu0 %v388
    %454 = vmatprep.subr.bf16.mxu0 %v391
    %455 = vmatpush1.bf16.msra.mxu0 %v390
    %456 = vmatprep.subr.bf16.mxu0 %v393
    %457 = vmatpush1.bf16.msra.mxu0 %v392
    %458 = vmatprep.subr.bf16.mxu0 %v395
    %459 = vmatpush1.bf16.msra.mxu0 %v394
    %460 = vmatprep.subr.bf16.mxu0 %v397
    %461 = vmatpush1.bf16.msra.mxu0 %v396
    %462 = vmatprep.subr.bf16.mxu0 %v399
    %463 = vmatpush1.bf16.msra.mxu0 %v398
    %464 = vmatprep.subr.bf16.mxu0 %v401
    %465 = vmatpush1.bf16.msra.mxu0 %v400
    %466 = vmatprep.subr.bf16.mxu0 %v403
    %467 = vmatpush1.bf16.msra.mxu0 %v402
    %468 = vmatprep.subr.bf16.mxu0 %v405
    %469 = vmatpush1.bf16.msra.mxu0 %v404
    %470 = vmatprep.subr.bf16.mxu0 %v407
    %471 = vmatpush1.bf16.msra.mxu0 %v406
    %472 = vmatprep.subr.bf16.mxu0 %v409
    %473 = vmatpush1.bf16.msra.mxu0 %v408
    %474 = vmatprep.subr.bf16.mxu0 %v411
    %475 = vmatpush1.bf16.msra.mxu0 %v410
    %476 = vmatprep.mubr.bf16.mxu0 %v239
    %477 = vmatmul.mubr.bf16.gmra.mrb[0].mxu0 %v238
    %v478 = vpop.f32.mrb[0].mxu0
    %v479 = vadd.f32 %v277, %v478
    %v480 = vpop.f32.mrb[0].mxu0
    %v481 = vadd.f32 %v281, %v480
    %v482 = vpop.f32.mrb[0].mxu0
    %v483 = vpop.f32.mrb[0].mxu0
    %484 = vdwg.mxu0
    %v485 = vmax.f32 %v479, 0.0
    %v486 = vmax.f32 %v481, 0.0
    %v487 = vpack.c.bf16 %v485, %v485
    %v488 = vpack.c.bf16 %v486, %v486
    %v489 = vld [vmem:[#allocation9] sm:$0xff]
    %v490 = vld [vmem:[#allocation9 + $0x8] sm:$0xff]
    %v491 = vld [vmem:[#allocation9 + $0x10] sm:$0xff]
    %v492 = vld [vmem:[#allocation9 + $0x18] sm:$0xff]
    %v493 = vld [vmem:[#allocation9 + $0x20] sm:$0xff]
    %v494 = vld [vmem:[#allocation9 + $0x28] sm:$0xff]
    %v495 = vld [vmem:[#allocation9 + $0x30] sm:$0xff]
    %v496 = vld [vmem:[#allocation9 + $0x38] sm:$0xff]
    %v497 = vld [vmem:[#allocation9 + $0x40] sm:$0xff]
    %v498 = vld [vmem:[#allocation9 + $0x48] sm:$0xff]
    %v499 = vld [vmem:[#allocation9 + $0x50] sm:$0xff]
    %v500 = vld [vmem:[#allocation9 + $0x58] sm:$0xff]
    %v501 = vld [vmem:[#allocation9 + $0x60] sm:$0xff]
    %v502 = vld [vmem:[#allocation9 + $0x68] sm:$0xff]
    %v503 = vld [vmem:[#allocation9 + $0x70] sm:$0xff]
    %v504 = vld [vmem:[#allocation9 + $0x78] sm:$0xff]
    %v505 = vld [vmem:[#allocation9 + $0x80] sm:$0xff]
    %v506 = vld [vmem:[#allocation9 + $0x88] sm:$0xff]
    %v507 = vld [vmem:[#allocation9 + $0x90] sm:$0xff]
    %v508 = vld [vmem:[#allocation9 + $0x98] sm:$0xff]
    %v509 = vld [vmem:[#allocation9 + $0xa0] sm:$0xff]
    %v510 = vld [vmem:[#allocation9 + $0xa8] sm:$0xff]
    %v511 = vld [vmem:[#allocation9 + $0xb0] sm:$0xff]
    %v512 = vld [vmem:[#allocation9 + $0xb8] sm:$0xff]
    %v513 = vld [vmem:[#allocation9 + $0xc0] sm:$0xff]
    %v514 = vld [vmem:[#allocation9 + $0xc8] sm:$0xff]
    %v515 = vld [vmem:[#allocation9 + $0xd0] sm:$0xff]
    %v516 = vld [vmem:[#allocation9 + $0xd8] sm:$0xff]
    %v517 = vld [vmem:[#allocation9 + $0xe0] sm:$0xff]
    %v518 = vld [vmem:[#allocation9 + $0xe8] sm:$0xff]
    %v519 = vld [vmem:[#allocation9 + $0xf0] sm:$0xff]
    %v520 = vld [vmem:[#allocation9 + $0xf8] sm:$0xff]
    %v521 = vld [vmem:[#allocation9 + $0x100] sm:$0xff]
    %v522 = vld [vmem:[#allocation9 + $0x108] sm:$0xff]
    %v523 = vld [vmem:[#allocation9 + $0x110] sm:$0xff]
    %v524 = vld [vmem:[#allocation9 + $0x118] sm:$0xff]
    %v525 = vld [vmem:[#allocation9 + $0x120] sm:$0xff]
    %v526 = vld [vmem:[#allocation9 + $0x128] sm:$0xff]
    %v527 = vld [vmem:[#allocation9 + $0x130] sm:$0xff]
    %v528 = vld [vmem:[#allocation9 + $0x138] sm:$0xff]
    %v529 = vld [vmem:[#allocation9 + $0x140] sm:$0xff]
    %v530 = vld [vmem:[#allocation9 + $0x148] sm:$0xff]
    %v531 = vld [vmem:[#allocation9 + $0x150] sm:$0xff]
    %v532 = vld [vmem:[#allocation9 + $0x158] sm:$0xff]
    %v533 = vld [vmem:[#allocation9 + $0x160] sm:$0xff]
    %v534 = vld [vmem:[#allocation9 + $0x168] sm:$0xff]
    %v535 = vld [vmem:[#allocation9 + $0x170] sm:$0xff]
    %v536 = vld [vmem:[#allocation9 + $0x178] sm:$0xff]
    %v537 = vld [vmem:[#allocation9 + $0x180] sm:$0xff]
    %v538 = vld [vmem:[#allocation9 + $0x188] sm:$0xff]
    %v539 = vld [vmem:[#allocation9 + $0x190] sm:$0xff]
    %v540 = vld [vmem:[#allocation9 + $0x198] sm:$0xff]
    %v541 = vld [vmem:[#allocation9 + $0x1a0] sm:$0xff]
    %v542 = vld [vmem:[#allocation9 + $0x1a8] sm:$0xff]
    %v543 = vld [vmem:[#allocation9 + $0x1b0] sm:$0xff]
    %v544 = vld [vmem:[#allocation9 + $0x1b8] sm:$0xff]
    %v545 = vld [vmem:[#allocation9 + $0x1c0] sm:$0xff]
    %v546 = vld [vmem:[#allocation9 + $0x1c8] sm:$0xff]
    %v547 = vld [vmem:[#allocation9 + $0x1d0] sm:$0xff]
    %v548 = vld [vmem:[#allocation9 + $0x1d8] sm:$0xff]
    %v549 = vld [vmem:[#allocation9 + $0x1e0] sm:$0xff]
    %v550 = vld [vmem:[#allocation9 + $0x1e8] sm:$0xff]
    %v551 = vld [vmem:[#allocation9 + $0x1f0] sm:$0xff]
    %v552 = vld [vmem:[#allocation9 + $0x1f8] sm:$0xff]
    %v553 = vld [vmem:[#allocation9 + $0x200] sm:$0xff]
    %v554 = vld [vmem:[#allocation9 + $0x208] sm:$0xff]
    %v555 = vld [vmem:[#allocation9 + $0x210] sm:$0xff]
    %v556 = vld [vmem:[#allocation9 + $0x218] sm:$0xff]
    %v557 = vld [vmem:[#allocation9 + $0x220] sm:$0xff]
    %v558 = vld [vmem:[#allocation9 + $0x228] sm:$0xff]
    %v559 = vld [vmem:[#allocation9 + $0x230] sm:$0xff]
    %v560 = vld [vmem:[#allocation9 + $0x238] sm:$0xff]
    %v561 = vld [vmem:[#allocation9 + $0x240] sm:$0xff]
    %v562 = vld [vmem:[#allocation9 + $0x248] sm:$0xff]
    %v563 = vld [vmem:[#allocation9 + $0x250] sm:$0xff]
    %v564 = vld [vmem:[#allocation9 + $0x258] sm:$0xff]
    %v565 = vld [vmem:[#allocation9 + $0x260] sm:$0xff]
    %v566 = vld [vmem:[#allocation9 + $0x268] sm:$0xff]
    %v567 = vld [vmem:[#allocation9 + $0x270] sm:$0xff]
    %v568 = vld [vmem:[#allocation9 + $0x278] sm:$0xff]
    %v569 = vld [vmem:[#allocation9 + $0x280] sm:$0xff]
    %v570 = vld [vmem:[#allocation9 + $0x288] sm:$0xff]
    %v571 = vld [vmem:[#allocation9 + $0x290] sm:$0xff]
    %v572 = vld [vmem:[#allocation9 + $0x298] sm:$0xff]
    %v573 = vld [vmem:[#allocation9 + $0x2a0] sm:$0xff]
    %v574 = vld [vmem:[#allocation9 + $0x2a8] sm:$0xff]
    %v575 = vld [vmem:[#allocation9 + $0x2b0] sm:$0xff]
    %v576 = vld [vmem:[#allocation9 + $0x2b8] sm:$0xff]
    %v577 = vld [vmem:[#allocation9 + $0x2c0] sm:$0xff]
    %v578 = vld [vmem:[#allocation9 + $0x2c8] sm:$0xff]
    %v579 = vld [vmem:[#allocation9 + $0x2d0] sm:$0xff]
    %v580 = vld [vmem:[#allocation9 + $0x2d8] sm:$0xff]
    %v581 = vld [vmem:[#allocation9 + $0x2e0] sm:$0xff]
    %v582 = vld [vmem:[#allocation9 + $0x2e8] sm:$0xff]
    %v583 = vld [vmem:[#allocation9 + $0x2f0] sm:$0xff]
    %v584 = vld [vmem:[#allocation9 + $0x2f8] sm:$0xff]
    %v585 = vld [vmem:[#allocation9 + $0x300] sm:$0xff]
    %v586 = vld [vmem:[#allocation9 + $0x308] sm:$0xff]
    %v587 = vld [vmem:[#allocation9 + $0x310] sm:$0xff]
    %v588 = vld [vmem:[#allocation9 + $0x318] sm:$0xff]
    %v589 = vld [vmem:[#allocation9 + $0x320] sm:$0xff]
    %v590 = vld [vmem:[#allocation9 + $0x328] sm:$0xff]
    %v591 = vld [vmem:[#allocation9 + $0x330] sm:$0xff]
    %v592 = vld [vmem:[#allocation9 + $0x338] sm:$0xff]
    %v593 = vld [vmem:[#allocation9 + $0x340] sm:$0xff]
    %v594 = vld [vmem:[#allocation9 + $0x348] sm:$0xff]
    %v595 = vld [vmem:[#allocation9 + $0x350] sm:$0xff]
    %v596 = vld [vmem:[#allocation9 + $0x358] sm:$0xff]
    %v597 = vld [vmem:[#allocation9 + $0x360] sm:$0xff]
    %v598 = vld [vmem:[#allocation9 + $0x368] sm:$0xff]
    %v599 = vld [vmem:[#allocation9 + $0x370] sm:$0xff]
    %v600 = vld [vmem:[#allocation9 + $0x378] sm:$0xff]
    %v601 = vld [vmem:[#allocation9 + $0x380] sm:$0xff]
    %v602 = vld [vmem:[#allocation9 + $0x388] sm:$0xff]
    %v603 = vld [vmem:[#allocation9 + $0x390] sm:$0xff]
    %v604 = vld [vmem:[#allocation9 + $0x398] sm:$0xff]
    %v605 = vld [vmem:[#allocation9 + $0x3a0] sm:$0xff]
    %v606 = vld [vmem:[#allocation9 + $0x3a8] sm:$0xff]
    %v607 = vld [vmem:[#allocation9 + $0x3b0] sm:$0xff]
    %v608 = vld [vmem:[#allocation9 + $0x3b8] sm:$0xff]
    %v609 = vld [vmem:[#allocation9 + $0x3c0] sm:$0xff]
    %v610 = vld [vmem:[#allocation9 + $0x3c8] sm:$0xff]
    %v611 = vld [vmem:[#allocation9 + $0x3d0] sm:$0xff]
    %v612 = vld [vmem:[#allocation9 + $0x3d8] sm:$0xff]
    %v613 = vld [vmem:[#allocation9 + $0x3e0] sm:$0xff]
    %v614 = vld [vmem:[#allocation9 + $0x3e8] sm:$0xff]
    %v615 = vld [vmem:[#allocation9 + $0x3f0] sm:$0xff]
    %v616 = vld [vmem:[#allocation9 + $0x3f8] sm:$0xff]
    %v617 = vld [vmem:[%s6] sm:$0xff]
    %v619 = vlaneseq
    %v620 = vshrl.u32 %v619, 7
    %v621 = vsub.s32 0, %v620
    %v622 = vrot.slane %v617, %v621
    %v623 = vlaneseq
    %v624 = vshrl.u32 %v623, 7
    %v625 = vsub.s32 1, %v624
    %v626 = vrot.slane %v617, %v625
    %v627 = vlaneseq
    %v628 = vshrl.u32 %v627, 7
    %v629 = vsub.s32 2, %v628
    %v630 = vrot.slane %v617, %v629
    %v631 = vlaneseq
    %v632 = vshrl.u32 %v631, 7
    %v633 = vsub.s32 3, %v632
    %v634 = vrot.slane %v617, %v633
    %v635 = vlaneseq
    %v636 = vshrl.u32 %v635, 7
    %v637 = vsub.s32 4, %v636
    %v638 = vrot.slane %v617, %v637
    %v639 = vlaneseq
    %v640 = vshrl.u32 %v639, 7
    %v641 = vsub.s32 5, %v640
    %v642 = vrot.slane %v617, %v641
    %v643 = vlaneseq
    %v644 = vshrl.u32 %v643, 7
    %v645 = vsub.s32 6, %v644
    %v646 = vrot.slane %v617, %v645
    %v647 = vlaneseq
    %v648 = vshrl.u32 %v647, 7
    %v649 = vsub.s32 7, %v648
    %v650 = vrot.slane %v617, %v649
    %v787 = vunpack.c.l.b16 %v489
    %v788 = vunpack.c.h.b16 %v489
    %v789 = vunpack.c.l.b16 %v490
    %v790 = vunpack.c.h.b16 %v490
    %v791 = vunpack.c.l.b16 %v491
    %v792 = vunpack.c.h.b16 %v491
    %v793 = vunpack.c.l.b16 %v492
    %v794 = vunpack.c.h.b16 %v492
    %v795 = vunpack.c.l.b16 %v493
    %v796 = vunpack.c.h.b16 %v493
    %v797 = vunpack.c.l.b16 %v494
    %v798 = vunpack.c.h.b16 %v494
    %v799 = vunpack.c.l.b16 %v495
    %v800 = vunpack.c.h.b16 %v495
    %v801 = vunpack.c.l.b16 %v496
    %v802 = vunpack.c.h.b16 %v496
    %v803 = vunpack.c.l.b16 %v497
    %v804 = vunpack.c.h.b16 %v497
    %v805 = vunpack.c.l.b16 %v498
    %v806 = vunpack.c.h.b16 %v498
    %v807 = vunpack.c.l.b16 %v499
    %v808 = vunpack.c.h.b16 %v499
    %v809 = vunpack.c.l.b16 %v500
    %v810 = vunpack.c.h.b16 %v500
    %v811 = vunpack.c.l.b16 %v501
    %v812 = vunpack.c.h.b16 %v501
    %v813 = vunpack.c.l.b16 %v502
    %v814 = vunpack.c.h.b16 %v502
    %v815 = vunpack.c.l.b16 %v503
    %v816 = vunpack.c.h.b16 %v503
    %v817 = vunpack.c.l.b16 %v504
    %v818 = vunpack.c.h.b16 %v504
    %v819 = vunpack.c.l.b16 %v505
    %v820 = vunpack.c.h.b16 %v505
    %v821 = vunpack.c.l.b16 %v506
    %v822 = vunpack.c.h.b16 %v506
    %v823 = vunpack.c.l.b16 %v507
    %v824 = vunpack.c.h.b16 %v507
    %v825 = vunpack.c.l.b16 %v508
    %v826 = vunpack.c.h.b16 %v508
    %v827 = vunpack.c.l.b16 %v509
    %v828 = vunpack.c.h.b16 %v509
    %v829 = vunpack.c.l.b16 %v510
    %v830 = vunpack.c.h.b16 %v510
    %v831 = vunpack.c.l.b16 %v511
    %v832 = vunpack.c.h.b16 %v511
    %v833 = vunpack.c.l.b16 %v512
    %v834 = vunpack.c.h.b16 %v512
    %v835 = vunpack.c.l.b16 %v513
    %v836 = vunpack.c.h.b16 %v513
    %v837 = vunpack.c.l.b16 %v514
    %v838 = vunpack.c.h.b16 %v514
    %v839 = vunpack.c.l.b16 %v515
    %v840 = vunpack.c.h.b16 %v515
    %v841 = vunpack.c.l.b16 %v516
    %v842 = vunpack.c.h.b16 %v516
    %v843 = vunpack.c.l.b16 %v517
    %v844 = vunpack.c.h.b16 %v517
    %v845 = vunpack.c.l.b16 %v518
    %v846 = vunpack.c.h.b16 %v518
    %v847 = vunpack.c.l.b16 %v519
    %v848 = vunpack.c.h.b16 %v519
    %v849 = vunpack.c.l.b16 %v520
    %v850 = vunpack.c.h.b16 %v520
    %v851 = vunpack.c.l.b16 %v521
    %v852 = vunpack.c.h.b16 %v521
    %v853 = vunpack.c.l.b16 %v522
    %v854 = vunpack.c.h.b16 %v522
    %v855 = vunpack.c.l.b16 %v523
    %v856 = vunpack.c.h.b16 %v523
    %v857 = vunpack.c.l.b16 %v524
    %v858 = vunpack.c.h.b16 %v524
    %v859 = vunpack.c.l.b16 %v525
    %v860 = vunpack.c.h.b16 %v525
    %v861 = vunpack.c.l.b16 %v526
    %v862 = vunpack.c.h.b16 %v526
    %v863 = vunpack.c.l.b16 %v527
    %v864 = vunpack.c.h.b16 %v527
    %v865 = vunpack.c.l.b16 %v528
    %v866 = vunpack.c.h.b16 %v528
    %v867 = vunpack.c.l.b16 %v529
    %v868 = vunpack.c.h.b16 %v529
    %v869 = vunpack.c.l.b16 %v530
    %v870 = vunpack.c.h.b16 %v530
    %v871 = vunpack.c.l.b16 %v531
    %v872 = vunpack.c.h.b16 %v531
    %v873 = vunpack.c.l.b16 %v532
    %v874 = vunpack.c.h.b16 %v532
    %v875 = vunpack.c.l.b16 %v533
    %v876 = vunpack.c.h.b16 %v533
    %v877 = vunpack.c.l.b16 %v534
    %v878 = vunpack.c.h.b16 %v534
    %v879 = vunpack.c.l.b16 %v535
    %v880 = vunpack.c.h.b16 %v535
    %v881 = vunpack.c.l.b16 %v536
    %v882 = vunpack.c.h.b16 %v536
    %v883 = vunpack.c.l.b16 %v537
    %v884 = vunpack.c.h.b16 %v537
    %v885 = vunpack.c.l.b16 %v538
    %v886 = vunpack.c.h.b16 %v538
    %v887 = vunpack.c.l.b16 %v539
    %v888 = vunpack.c.h.b16 %v539
    %v889 = vunpack.c.l.b16 %v540
    %v890 = vunpack.c.h.b16 %v540
    %v891 = vunpack.c.l.b16 %v541
    %v892 = vunpack.c.h.b16 %v541
    %v893 = vunpack.c.l.b16 %v542
    %v894 = vunpack.c.h.b16 %v542
    %v895 = vunpack.c.l.b16 %v543
    %v896 = vunpack.c.h.b16 %v543
    %v897 = vunpack.c.l.b16 %v544
    %v898 = vunpack.c.h.b16 %v544
    %v899 = vunpack.c.l.b16 %v545
    %v900 = vunpack.c.h.b16 %v545
    %v901 = vunpack.c.l.b16 %v546
    %v902 = vunpack.c.h.b16 %v546
    %v903 = vunpack.c.l.b16 %v547
    %v904 = vunpack.c.h.b16 %v547
    %v905 = vunpack.c.l.b16 %v548
    %v906 = vunpack.c.h.b16 %v548
    %v907 = vunpack.c.l.b16 %v549
    %v908 = vunpack.c.h.b16 %v549
    %v909 = vunpack.c.l.b16 %v550
    %v910 = vunpack.c.h.b16 %v550
    %v911 = vunpack.c.l.b16 %v551
    %v912 = vunpack.c.h.b16 %v551
    %v913 = vunpack.c.l.b16 %v552
    %v914 = vunpack.c.h.b16 %v552
    %v915 = vunpack.c.l.b16 %v553
    %v916 = vunpack.c.h.b16 %v553
    %v917 = vunpack.c.l.b16 %v554
    %v918 = vunpack.c.h.b16 %v554
    %v919 = vunpack.c.l.b16 %v555
    %v920 = vunpack.c.h.b16 %v555
    %v921 = vunpack.c.l.b16 %v556
    %v922 = vunpack.c.h.b16 %v556
    %v923 = vunpack.c.l.b16 %v557
    %v924 = vunpack.c.h.b16 %v557
    %v925 = vunpack.c.l.b16 %v558
    %v926 = vunpack.c.h.b16 %v558
    %v927 = vunpack.c.l.b16 %v559
    %v928 = vunpack.c.h.b16 %v559
    %v929 = vunpack.c.l.b16 %v560
    %v930 = vunpack.c.h.b16 %v560
    %v931 = vunpack.c.l.b16 %v561
    %v932 = vunpack.c.h.b16 %v561
    %v933 = vunpack.c.l.b16 %v562
    %v934 = vunpack.c.h.b16 %v562
    %v935 = vunpack.c.l.b16 %v563
    %v936 = vunpack.c.h.b16 %v563
    %v937 = vunpack.c.l.b16 %v564
    %v938 = vunpack.c.h.b16 %v564
    %v939 = vunpack.c.l.b16 %v565
    %v940 = vunpack.c.h.b16 %v565
    %v941 = vunpack.c.l.b16 %v566
    %v942 = vunpack.c.h.b16 %v566
    %v943 = vunpack.c.l.b16 %v567
    %v944 = vunpack.c.h.b16 %v567
    %v945 = vunpack.c.l.b16 %v568
    %v946 = vunpack.c.h.b16 %v568
    %v947 = vunpack.c.l.b16 %v569
    %v948 = vunpack.c.h.b16 %v569
    %v949 = vunpack.c.l.b16 %v570
    %v950 = vunpack.c.h.b16 %v570
    %v951 = vunpack.c.l.b16 %v571
    %v952 = vunpack.c.h.b16 %v571
    %v953 = vunpack.c.l.b16 %v572
    %v954 = vunpack.c.h.b16 %v572
    %v955 = vunpack.c.l.b16 %v573
    %v956 = vunpack.c.h.b16 %v573
    %v957 = vunpack.c.l.b16 %v574
    %v958 = vunpack.c.h.b16 %v574
    %v959 = vunpack.c.l.b16 %v575
    %v960 = vunpack.c.h.b16 %v575
    %v961 = vunpack.c.l.b16 %v576
    %v962 = vunpack.c.h.b16 %v576
    %v963 = vunpack.c.l.b16 %v577
    %v964 = vunpack.c.h.b16 %v577
    %v965 = vunpack.c.l.b16 %v578
    %v966 = vunpack.c.h.b16 %v578
    %v967 = vunpack.c.l.b16 %v579
    %v968 = vunpack.c.h.b16 %v579
    %v969 = vunpack.c.l.b16 %v580
    %v970 = vunpack.c.h.b16 %v580
    %v971 = vunpack.c.l.b16 %v581
    %v972 = vunpack.c.h.b16 %v581
    %v973 = vunpack.c.l.b16 %v582
    %v974 = vunpack.c.h.b16 %v582
    %v975 = vunpack.c.l.b16 %v583
    %v976 = vunpack.c.h.b16 %v583
    %v977 = vunpack.c.l.b16 %v584
    %v978 = vunpack.c.h.b16 %v584
    %v979 = vunpack.c.l.b16 %v585
    %v980 = vunpack.c.h.b16 %v585
    %v981 = vunpack.c.l.b16 %v586
    %v982 = vunpack.c.h.b16 %v586
    %v983 = vunpack.c.l.b16 %v587
    %v984 = vunpack.c.h.b16 %v587
    %v985 = vunpack.c.l.b16 %v588
    %v986 = vunpack.c.h.b16 %v588
    %v987 = vunpack.c.l.b16 %v589
    %v988 = vunpack.c.h.b16 %v589
    %v989 = vunpack.c.l.b16 %v590
    %v990 = vunpack.c.h.b16 %v590
    %v991 = vunpack.c.l.b16 %v591
    %v992 = vunpack.c.h.b16 %v591
    %v993 = vunpack.c.l.b16 %v592
    %v994 = vunpack.c.h.b16 %v592
    %v995 = vunpack.c.l.b16 %v593
    %v996 = vunpack.c.h.b16 %v593
    %v997 = vunpack.c.l.b16 %v594
    %v998 = vunpack.c.h.b16 %v594
    %v999 = vunpack.c.l.b16 %v595
    %v1000 = vunpack.c.h.b16 %v595
    %v1001 = vunpack.c.l.b16 %v596
    %v1002 = vunpack.c.h.b16 %v596
    %v1003 = vunpack.c.l.b16 %v597
    %v1004 = vunpack.c.h.b16 %v597
    %v1005 = vunpack.c.l.b16 %v598
    %v1006 = vunpack.c.h.b16 %v598
    %v1007 = vunpack.c.l.b16 %v599
    %v1008 = vunpack.c.h.b16 %v599
    %v1009 = vunpack.c.l.b16 %v600
    %v1010 = vunpack.c.h.b16 %v600
    %v1011 = vunpack.c.l.b16 %v601
    %v1012 = vunpack.c.h.b16 %v601
    %v1013 = vunpack.c.l.b16 %v602
    %v1014 = vunpack.c.h.b16 %v602
    %v1015 = vunpack.c.l.b16 %v603
    %v1016 = vunpack.c.h.b16 %v603
    %v1017 = vunpack.c.l.b16 %v604
    %v1018 = vunpack.c.h.b16 %v604
    %v1019 = vunpack.c.l.b16 %v605
    %v1020 = vunpack.c.h.b16 %v605
    %v1021 = vunpack.c.l.b16 %v606
    %v1022 = vunpack.c.h.b16 %v606
    %v1023 = vunpack.c.l.b16 %v607
    %v1024 = vunpack.c.h.b16 %v607
    %v1025 = vunpack.c.l.b16 %v608
    %v1026 = vunpack.c.h.b16 %v608
    %v1027 = vunpack.c.l.b16 %v609
    %v1028 = vunpack.c.h.b16 %v609
    %v1029 = vunpack.c.l.b16 %v610
    %v1030 = vunpack.c.h.b16 %v610
    %v1031 = vunpack.c.l.b16 %v611
    %v1032 = vunpack.c.h.b16 %v611
    %v1033 = vunpack.c.l.b16 %v612
    %v1034 = vunpack.c.h.b16 %v612
    %v1035 = vunpack.c.l.b16 %v613
    %v1036 = vunpack.c.h.b16 %v613
    %v1037 = vunpack.c.l.b16 %v614
    %v1038 = vunpack.c.h.b16 %v614
    %v1039 = vunpack.c.l.b16 %v615
    %v1040 = vunpack.c.h.b16 %v615
    %v1041 = vunpack.c.l.b16 %v616
    %v1042 = vunpack.c.h.b16 %v616
    %v1043 = vpack.c.b16 %v795, %v787
    %v1044 = vpack.c.b16 %v796, %v788
    %v1045 = vpack.c.b16 %v797, %v789
    %v1046 = vpack.c.b16 %v798, %v790
    %v1047 = vpack.c.b16 %v799, %v791
    %v1048 = vpack.c.b16 %v800, %v792
    %v1049 = vpack.c.b16 %v801, %v793
    %v1050 = vpack.c.b16 %v802, %v794
    %v1051 = vpack.c.b16 %v811, %v803
    %v1052 = vpack.c.b16 %v812, %v804
    %v1053 = vpack.c.b16 %v813, %v805
    %v1054 = vpack.c.b16 %v814, %v806
    %v1055 = vpack.c.b16 %v815, %v807
    %v1056 = vpack.c.b16 %v816, %v808
    %v1057 = vpack.c.b16 %v817, %v809
    %v1058 = vpack.c.b16 %v818, %v810
    %v1059 = vpack.c.b16 %v827, %v819
    %v1060 = vpack.c.b16 %v828, %v820
    %v1061 = vpack.c.b16 %v829, %v821
    %v1062 = vpack.c.b16 %v830, %v822
    %v1063 = vpack.c.b16 %v831, %v823
    %v1064 = vpack.c.b16 %v832, %v824
    %v1065 = vpack.c.b16 %v833, %v825
    %v1066 = vpack.c.b16 %v834, %v826
    %v1067 = vpack.c.b16 %v843, %v835
    %v1068 = vpack.c.b16 %v844, %v836
    %v1069 = vpack.c.b16 %v845, %v837
    %v1070 = vpack.c.b16 %v846, %v838
    %v1071 = vpack.c.b16 %v847, %v839
    %v1072 = vpack.c.b16 %v848, %v840
    %v1073 = vpack.c.b16 %v849, %v841
    %v1074 = vpack.c.b16 %v850, %v842
    %v1075 = vpack.c.b16 %v859, %v851
    %v1076 = vpack.c.b16 %v860, %v852
    %v1077 = vpack.c.b16 %v861, %v853
    %v1078 = vpack.c.b16 %v862, %v854
    %v1079 = vpack.c.b16 %v863, %v855
    %v1080 = vpack.c.b16 %v864, %v856
    %v1081 = vpack.c.b16 %v865, %v857
    %v1082 = vpack.c.b16 %v866, %v858
    %v1083 = vpack.c.b16 %v875, %v867
    %v1084 = vpack.c.b16 %v876, %v868
    %v1085 = vpack.c.b16 %v877, %v869
    %v1086 = vpack.c.b16 %v878, %v870
    %v1087 = vpack.c.b16 %v879, %v871
    %v1088 = vpack.c.b16 %v880, %v872
    %v1089 = vpack.c.b16 %v881, %v873
    %v1090 = vpack.c.b16 %v882, %v874
    %v1091 = vpack.c.b16 %v891, %v883
    %v1092 = vpack.c.b16 %v892, %v884
    %v1093 = vpack.c.b16 %v893, %v885
    %v1094 = vpack.c.b16 %v894, %v886
    %v1095 = vpack.c.b16 %v895, %v887
    %v1096 = vpack.c.b16 %v896, %v888
    %v1097 = vpack.c.b16 %v897, %v889
    %v1098 = vpack.c.b16 %v898, %v890
    %v1099 = vpack.c.b16 %v907, %v899
    %v1100 = vpack.c.b16 %v908, %v900
    %v1101 = vpack.c.b16 %v909, %v901
    %v1102 = vpack.c.b16 %v910, %v902
    %v1103 = vpack.c.b16 %v911, %v903
    %v1104 = vpack.c.b16 %v912, %v904
    %v1105 = vpack.c.b16 %v913, %v905
    %v1106 = vpack.c.b16 %v914, %v906
    %v1107 = vpack.c.b16 %v923, %v915
    %v1108 = vpack.c.b16 %v924, %v916
    %v1109 = vpack.c.b16 %v925, %v917
    %v1110 = vpack.c.b16 %v926, %v918
    %v1111 = vpack.c.b16 %v927, %v919
    %v1112 = vpack.c.b16 %v928, %v920
    %v1113 = vpack.c.b16 %v929, %v921
    %v1114 = vpack.c.b16 %v930, %v922
    %v1115 = vpack.c.b16 %v939, %v931
    %v1116 = vpack.c.b16 %v940, %v932
    %v1117 = vpack.c.b16 %v941, %v933
    %v1118 = vpack.c.b16 %v942, %v934
    %v1119 = vpack.c.b16 %v943, %v935
    %v1120 = vpack.c.b16 %v944, %v936
    %v1121 = vpack.c.b16 %v945, %v937
    %v1122 = vpack.c.b16 %v946, %v938
    %v1123 = vpack.c.b16 %v955, %v947
    %v1124 = vpack.c.b16 %v956, %v948
    %v1125 = vpack.c.b16 %v957, %v949
    %v1126 = vpack.c.b16 %v958, %v950
    %v1127 = vpack.c.b16 %v959, %v951
    %v1128 = vpack.c.b16 %v960, %v952
    %v1129 = vpack.c.b16 %v961, %v953
    %v1130 = vpack.c.b16 %v962, %v954
    %v1131 = vpack.c.b16 %v971, %v963
    %v1132 = vpack.c.b16 %v972, %v964
    %v1133 = vpack.c.b16 %v973, %v965
    %v1134 = vpack.c.b16 %v974, %v966
    %v1135 = vpack.c.b16 %v975, %v967
    %v1136 = vpack.c.b16 %v976, %v968
    %v1137 = vpack.c.b16 %v977, %v969
    %v1138 = vpack.c.b16 %v978, %v970
    %v1139 = vpack.c.b16 %v987, %v979
    %v1140 = vpack.c.b16 %v988, %v980
    %v1141 = vpack.c.b16 %v989, %v981
    %v1142 = vpack.c.b16 %v990, %v982
    %v1143 = vpack.c.b16 %v991, %v983
    %v1144 = vpack.c.b16 %v992, %v984
    %v1145 = vpack.c.b16 %v993, %v985
    %v1146 = vpack.c.b16 %v994, %v986
    %v1147 = vpack.c.b16 %v1003, %v995
    %v1148 = vpack.c.b16 %v1004, %v996
    %v1149 = vpack.c.b16 %v1005, %v997
    %v1150 = vpack.c.b16 %v1006, %v998
    %v1151 = vpack.c.b16 %v1007, %v999
    %v1152 = vpack.c.b16 %v1008, %v1000
    %v1153 = vpack.c.b16 %v1009, %v1001
    %v1154 = vpack.c.b16 %v1010, %v1002
    %v1155 = vpack.c.b16 %v1019, %v1011
    %v1156 = vpack.c.b16 %v1020, %v1012
    %v1157 = vpack.c.b16 %v1021, %v1013
    %v1158 = vpack.c.b16 %v1022, %v1014
    %v1159 = vpack.c.b16 %v1023, %v1015
    %v1160 = vpack.c.b16 %v1024, %v1016
    %v1161 = vpack.c.b16 %v1025, %v1017
    %v1162 = vpack.c.b16 %v1026, %v1018
    %v1163 = vpack.c.b16 %v1035, %v1027
    %v1164 = vpack.c.b16 %v1036, %v1028
    %v1165 = vpack.c.b16 %v1037, %v1029
    %v1166 = vpack.c.b16 %v1038, %v1030
    %v1167 = vpack.c.b16 %v1039, %v1031
    %v1168 = vpack.c.b16 %v1040, %v1032
    %v1169 = vpack.c.b16 %v1041, %v1033
    %v1170 = vpack.c.b16 %v1042, %v1034
    %1299 = vmatprep.subr.bf16.mxu0 %v1044
    %1300 = vmatpush1.bf16.msra.mxu0 %v1043
    %1301 = vmatprep.subr.bf16.mxu0 %v1052
    %1302 = vmatpush1.bf16.msra.mxu0 %v1051
    %1303 = vmatprep.subr.bf16.mxu0 %v1060
    %1304 = vmatpush1.bf16.msra.mxu0 %v1059
    %1305 = vmatprep.subr.bf16.mxu0 %v1068
    %1306 = vmatpush1.bf16.msra.mxu0 %v1067
    %1307 = vmatprep.subr.bf16.mxu0 %v1076
    %1308 = vmatpush1.bf16.msra.mxu0 %v1075
    %1309 = vmatprep.subr.bf16.mxu0 %v1084
    %1310 = vmatpush1.bf16.msra.mxu0 %v1083
    %1311 = vmatprep.subr.bf16.mxu0 %v1092
    %1312 = vmatpush1.bf16.msra.mxu0 %v1091
    %1313 = vmatprep.subr.bf16.mxu0 %v1100
    %1314 = vmatpush1.bf16.msra.mxu0 %v1099
    %1315 = vmatprep.subr.bf16.mxu0 %v1108
    %1316 = vmatpush1.bf16.msra.mxu0 %v1107
    %1317 = vmatprep.subr.bf16.mxu0 %v1116
    %1318 = vmatpush1.bf16.msra.mxu0 %v1115
    %1319 = vmatprep.subr.bf16.mxu0 %v1124
    %1320 = vmatpush1.bf16.msra.mxu0 %v1123
    %1321 = vmatprep.subr.bf16.mxu0 %v1132
    %1322 = vmatpush1.bf16.msra.mxu0 %v1131
    %1323 = vmatprep.subr.bf16.mxu0 %v1140
    %1324 = vmatpush1.bf16.msra.mxu0 %v1139
    %1325 = vmatprep.subr.bf16.mxu0 %v1148
    %1326 = vmatpush1.bf16.msra.mxu0 %v1147
    %1327 = vmatprep.subr.bf16.mxu0 %v1156
    %1328 = vmatpush1.bf16.msra.mxu0 %v1155
    %1329 = vmatprep.subr.bf16.mxu0 %v1164
    %1330 = vmatpush1.bf16.msra.mxu0 %v1163
    %1331 = vmatprep.mubr.bf16.mxu0 %v488
    %1332 = vmatmul.mubr.bf16.gmra.mrb[0].mxu0 %v487
    %v1333 = vpop.f32.mrb[0].mxu0
    %v1334 = vadd.f32 %v622, %v1333
    %v1335 = vpop.f32.mrb[0].mxu0
    %v1336 = vadd.f32 %v626, %v1335
    %v1337 = vpop.f32.mrb[0].mxu0
    %v1338 = vpop.f32.mrb[0].mxu0
    %1339 = vdwg.mxu0
    %1340 = vmatprep.subr.bf16.mxu0 %v1046
    %1341 = vmatpush1.bf16.msra.mxu0 %v1045
    %1342 = vmatprep.subr.bf16.mxu0 %v1054
    %1343 = vmatpush1.bf16.msra.mxu0 %v1053
    %1344 = vmatprep.subr.bf16.mxu0 %v1062
    %1345 = vmatpush1.bf16.msra.mxu0 %v1061
    %1346 = vmatprep.subr.bf16.mxu0 %v1070
    %1347 = vmatpush1.bf16.msra.mxu0 %v1069
    %1348 = vmatprep.subr.bf16.mxu0 %v1078
    %1349 = vmatpush1.bf16.msra.mxu0 %v1077
    %1350 = vmatprep.subr.bf16.mxu0 %v1086
    %1351 = vmatpush1.bf16.msra.mxu0 %v1085
    %1352 = vmatprep.subr.bf16.mxu0 %v1094
    %1353 = vmatpush1.bf16.msra.mxu0 %v1093
    %1354 = vmatprep.subr.bf16.mxu0 %v1102
    %1355 = vmatpush1.bf16.msra.mxu0 %v1101
    %1356 = vmatprep.subr.bf16.mxu0 %v1110
    %1357 = vmatpush1.bf16.msra.mxu0 %v1109
    %1358 = vmatprep.subr.bf16.mxu0 %v1118
    %1359 = vmatpush1.bf16.msra.mxu0 %v1117
    %1360 = vmatprep.subr.bf16.mxu0 %v1126
    %1361 = vmatpush1.bf16.msra.mxu0 %v1125
    %1362 = vmatprep.subr.bf16.mxu0 %v1134
    %1363 = vmatpush1.bf16.msra.mxu0 %v1133
    %1364 = vmatprep.subr.bf16.mxu0 %v1142
    %1365 = vmatpush1.bf16.msra.mxu0 %v1141
    %1366 = vmatprep.subr.bf16.mxu0 %v1150
    %1367 = vmatpush1.bf16.msra.mxu0 %v1149
    %1368 = vmatprep.subr.bf16.mxu0 %v1158
    %1369 = vmatpush1.bf16.msra.mxu0 %v1157
    %1370 = vmatprep.subr.bf16.mxu0 %v1166
    %1371 = vmatpush1.bf16.msra.mxu0 %v1165
    %1372 = vmatprep.mubr.bf16.mxu0 %v488
    %1373 = vmatmul.mubr.bf16.gmra.mrb[0].mxu0 %v487
    %v1374 = vpop.f32.mrb[0].mxu0
    %v1375 = vadd.f32 %v630, %v1374
    %v1376 = vpop.f32.mrb[0].mxu0
    %v1377 = vadd.f32 %v634, %v1376
    %v1378 = vpop.f32.mrb[0].mxu0
    %v1379 = vpop.f32.mrb[0].mxu0
    %1380 = vdwg.mxu0
    %1381 = vmatprep.subr.bf16.mxu0 %v1048
    %1382 = vmatpush1.bf16.msra.mxu0 %v1047
    %1383 = vmatprep.subr.bf16.mxu0 %v1056
    %1384 = vmatpush1.bf16.msra.mxu0 %v1055
    %1385 = vmatprep.subr.bf16.mxu0 %v1064
    %1386 = vmatpush1.bf16.msra.mxu0 %v1063
    %1387 = vmatprep.subr.bf16.mxu0 %v1072
    %1388 = vmatpush1.bf16.msra.mxu0 %v1071
    %1389 = vmatprep.subr.bf16.mxu0 %v1080
    %1390 = vmatpush1.bf16.msra.mxu0 %v1079
    %1391 = vmatprep.subr.bf16.mxu0 %v1088
    %1392 = vmatpush1.bf16.msra.mxu0 %v1087
    %1393 = vmatprep.subr.bf16.mxu0 %v1096
    %1394 = vmatpush1.bf16.msra.mxu0 %v1095
    %1395 = vmatprep.subr.bf16.mxu0 %v1104
    %1396 = vmatpush1.bf16.msra.mxu0 %v1103
    %1397 = vmatprep.subr.bf16.mxu0 %v1112
    %1398 = vmatpush1.bf16.msra.mxu0 %v1111
    %1399 = vmatprep.subr.bf16.mxu0 %v1120
    %1400 = vmatpush1.bf16.msra.mxu0 %v1119
    %1401 = vmatprep.subr.bf16.mxu0 %v1128
    %1402 = vmatpush1.bf16.msra.mxu0 %v1127
    %1403 = vmatprep.subr.bf16.mxu0 %v1136
    %1404 = vmatpush1.bf16.msra.mxu0 %v1135
    %1405 = vmatprep.subr.bf16.mxu0 %v1144
    %1406 = vmatpush1.bf16.msra.mxu0 %v1143
    %1407 = vmatprep.subr.bf16.mxu0 %v1152
    %1408 = vmatpush1.bf16.msra.mxu0 %v1151
    %1409 = vmatprep.subr.bf16.mxu0 %v1160
    %1410 = vmatpush1.bf16.msra.mxu0 %v1159
    %1411 = vmatprep.subr.bf16.mxu0 %v1168
    %1412 = vmatpush1.bf16.msra.mxu0 %v1167
    %1413 = vmatprep.mubr.bf16.mxu0 %v488
    %1414 = vmatmul.mubr.bf16.gmra.mrb[0].mxu0 %v487
    %v1415 = vpop.f32.mrb[0].mxu0
    %v1416 = vadd.f32 %v638, %v1415
    %v1417 = vpop.f32.mrb[0].mxu0
    %v1418 = vadd.f32 %v642, %v1417
    %v1419 = vpop.f32.mrb[0].mxu0
    %v1420 = vpop.f32.mrb[0].mxu0
    %1421 = vdwg.mxu0
    %1422 = vmatprep.subr.bf16.mxu0 %v1050
    %1423 = vmatpush1.bf16.msra.mxu0 %v1049
    %1424 = vmatprep.subr.bf16.mxu0 %v1058
    %1425 = vmatpush1.bf16.msra.mxu0 %v1057
    %1426 = vmatprep.subr.bf16.mxu0 %v1066
    %1427 = vmatpush1.bf16.msra.mxu0 %v1065
    %1428 = vmatprep.subr.bf16.mxu0 %v1074
    %1429 = vmatpush1.bf16.msra.mxu0 %v1073
    %1430 = vmatprep.subr.bf16.mxu0 %v1082
    %1431 = vmatpush1.bf16.msra.mxu0 %v1081
    %1432 = vmatprep.subr.bf16.mxu0 %v1090
    %1433 = vmatpush1.bf16.msra.mxu0 %v1089
    %1434 = vmatprep.subr.bf16.mxu0 %v1098
    %1435 = vmatpush1.bf16.msra.mxu0 %v1097
    %1436 = vmatprep.subr.bf16.mxu0 %v1106
    %1437 = vmatpush1.bf16.msra.mxu0 %v1105
    %1438 = vmatprep.subr.bf16.mxu0 %v1114
    %1439 = vmatpush1.bf16.msra.mxu0 %v1113
    %1440 = vmatprep.subr.bf16.mxu0 %v1122
    %1441 = vmatpush1.bf16.msra.mxu0 %v1121
    %1442 = vmatprep.subr.bf16.mxu0 %v1130
    %1443 = vmatpush1.bf16.msra.mxu0 %v1129
    %1444 = vmatprep.subr.bf16.mxu0 %v1138
    %1445 = vmatpush1.bf16.msra.mxu0 %v1137
    %1446 = vmatprep.subr.bf16.mxu0 %v1146
    %1447 = vmatpush1.bf16.msra.mxu0 %v1145
    %1448 = vmatprep.subr.bf16.mxu0 %v1154
    %1449 = vmatpush1.bf16.msra.mxu0 %v1153
    %1450 = vmatprep.subr.bf16.mxu0 %v1162
    %1451 = vmatpush1.bf16.msra.mxu0 %v1161
    %1452 = vmatprep.subr.bf16.mxu0 %v1170
    %1453 = vmatpush1.bf16.msra.mxu0 %v1169
    %1454 = vmatprep.mubr.bf16.mxu0 %v488
    %1455 = vmatmul.mubr.bf16.gmra.mrb[0].mxu0 %v487
    %v1456 = vpop.f32.mrb[0].mxu0
    %v1457 = vadd.f32 %v646, %v1456
    %v1458 = vpop.f32.mrb[0].mxu0
    %v1459 = vadd.f32 %v650, %v1458
    %v1460 = vpop.f32.mrb[0].mxu0
    %v1461 = vpop.f32.mrb[0].mxu0
    %1462 = vdwg.mxu0
    %v1463 = vpack.c.bf16 %v1334, %v1334
    %v1464 = vpack.c.bf16 %v1336, %v1336
    %v1465 = vpack.c.bf16 %v1375, %v1375
    %v1466 = vpack.c.bf16 %v1377, %v1377
    %v1467 = vpack.c.bf16 %v1416, %v1416
    %v1468 = vpack.c.bf16 %v1418, %v1418
    %v1469 = vpack.c.bf16 %v1457, %v1457
    %v1470 = vpack.c.bf16 %v1459, %v1459
    %v1471 = vtanh.bf16.pop %v1463
    %v1472 = vtanh.bf16.pop %v1464
    %v1473 = vtanh.bf16.pop %v1465
    %v1474 = vtanh.bf16.pop %v1466
    %v1475 = vtanh.bf16.pop %v1467
    %v1476 = vtanh.bf16.pop %v1468
    %v1477 = vtanh.bf16.pop %v1469
    %v1478 = vtanh.bf16.pop %v1470
    %v1487 = vunpack.c.l.b16 %v1471
    %v1488 = vunpack.c.l.b16 %v1472
    %v1489 = vunpack.c.l.b16 %v1473
    %v1490 = vunpack.c.l.b16 %v1474
    %v1491 = vunpack.c.l.b16 %v1475
    %v1492 = vunpack.c.l.b16 %v1476
    %v1493 = vunpack.c.l.b16 %v1477
    %v1494 = vunpack.c.l.b16 %v1478
    %v1495 = vpack.c.b16 %v1488, %v1487
    %v1496 = vpack.c.b16 %v1490, %v1489
    %v1497 = vpack.c.b16 %v1492, %v1491
    %v1498 = vpack.c.b16 %v1494, %v1493
    %1503 = vst [vmem:[#allocation11] sm:$0xff] %v1495
    %1504 = vst [vmem:[#allocation11 + $0x8] sm:$0xff] %v1496
    %1505 = vst [vmem:[#allocation11 + $0x10] sm:$0xff] %v1497
    %1506 = vst [vmem:[#allocation11 + $0x18] sm:$0xff] %v1498
    // Predicated region
    $region46: #{tpu_custom_call.1} parent=1 // pred_check
      _
    $region47: #{tpu_custom_call.1} parent=1 // pred_check_branch
      %1508 = sbr.rel (0) target = $region49
    $region48: #{tpu_custom_call.1} parent=1 // pred_region
      %s1510 = ssub.s32 512, 512
      %1511 = vsyncadd [#allocation5], %s1510
      %s1513 = sshll.u32 [#allocation11], 4
      %s1514 = int_to_ptr.vmem [resolvable:$true] %s1513
      %1516 = dma.vmem_to_hbm [thread:$0]  %s1514, 512, %s7, [#allocation5]
    $region49: #{tpu_custom_call.1} parent=1 // pred_fallthru
      _
    // Predicated region
    $region50: #{tpu_custom_call.1} parent=1 // pred_check
      _
    $region51: #{tpu_custom_call.1} parent=1 // pred_check_branch
      %1518 = sbr.rel (0) target = $region53
    $region52: #{tpu_custom_call.1} parent=1 // pred_region
      %1519 = dma.done [#allocation5], 512
    $region53: #{tpu_custom_call.1} parent=1 // pred_fallthru
      _
    %1520 = vsyncpa [#allocation4], 1
    %1521 = vsyncpa [#allocation7], 1
    %1522 = vsyncpa [#allocation10], 1
    %1523 = vsyncpa [#allocation5], 1

</llo_original>
